<compile_context>
chip_gen: v5e
topology: v5e:2x2
jax: 0.10.0
libtpu: 0.0.40
codegen_flags: <defaults>
</compile_context>

<pallas_src>
import math

import jax
import jax.numpy as jnp
from jax.experimental import pallas as pl
from jax.experimental.pallas import tpu as pltpu


def _stacked_gru_kernel(x_ref, wih0_ref, h0_ref, wihr_ref, whh_ref,
                        brz_ref, bin_ref, bhn_ref,
                        h1_ref, carry_ref, gx_ref):
    """One GRUCell layer per grid step.

    Block shapes:
      x_ref    : (B, D_in)   bf16  layer-0 input (resident; constant index)
      wih0_ref : (D_in, 3H)  bf16  layer-0 W_ih^T (resident; constant index)
      h0_ref   : (1, B, H)   f32   previous hidden of layer l
      wihr_ref : (1, H, 3H)  bf16  W_ih^T of layer l (only used for l >= 1)
      whh_ref  : (1, H, 3H)  bf16  W_hh^T of layer l
      brz_ref  : (1, 1, 2H)  f32   b_ih + b_hh (r and z columns, pre-added)
      bin_ref  : (1, 1, H)   f32   b_ih, n column
      bhn_ref  : (1, 1, H)   f32   b_hh, n column
      h1_ref   : (1, B, H)   f32   new hidden of layer l (output)
      carry_ref: (B, H)      bf16  VMEM scratch: activation fed to layer l+1
      gx_ref   : (B, 3H)     f32   VMEM scratch: input-side gate pre-acts
    """
    l = pl.program_id(0)
    H = h0_ref.shape[-1]

    # Input-side pre-activations.  Layer 0 consumes the module input, layers
    # >= 1 consume the carried activation; both are native bf16 MXU matmuls
    # with f32 accumulation.
    @pl.when(l == 0)
    def _():
        gx_ref[...] = jnp.dot(x_ref[...], wih0_ref[...],
                              preferred_element_type=jnp.float32)

    @pl.when(l > 0)
    def _():
        gx_ref[...] = jnp.dot(carry_ref[...], wihr_ref[0],
                              preferred_element_type=jnp.float32)

    h_prev = h0_ref[0]                                         # (B, H) f32
    gh = jnp.dot(h_prev.astype(jnp.bfloat16), whh_ref[0],
                 preferred_element_type=jnp.float32)           # (B, 3H) f32
    gx = gx_ref[...]

    # torch.nn.GRUCell gate order: r, z, n  (r/z biases pre-added offline).
    rz = jax.nn.sigmoid(gx[:, :2 * H] + gh[:, :2 * H] + brz_ref[0])
    r = rz[:, :H]
    z = rz[:, H:]
    n = jnp.tanh(gx[:, 2 * H:] + bin_ref[0] + r * (gh[:, 2 * H:] + bhn_ref[0]))
    h_new = n + z * (h_prev - n)                               # == (1-z)*n + z*h

    h1_ref[0] = h_new.astype(h1_ref.dtype)

    # Feed layer l+1.  Dropout between layers is identity in eval mode.
    # TODO(synk): training-mode dropout mask via pltpu.prng_random_bits here.
    @pl.when(l + 1 < pl.num_programs(0))
    def _():
        carry_ref[...] = h_new.astype(carry_ref.dtype)


def init_stacked_gru_params(key, num_layers, input_size, hidden_size,
                            weight_dtype=jnp.bfloat16):
    """PyTorch-style init U(-1/sqrt(H), 1/sqrt(H)); weights pre-transposed to
    (D, 3H), gate order (r, z, n), stored in bf16.  Layer 0's W_ih is kept
    separate so no zero-padded rows are ever DMA'd for layers >= 1."""
    bound = 1.0 / math.sqrt(hidden_size)
    H = hidden_size
    w_ih0 = None
    w_ihr, w_hh_l, b_rz_l, b_in_l, b_hn_l = [], [], [], [], []
    d_in = input_size
    for layer in range(num_layers):
        key, k1, k2, k3, k4 = jax.random.split(key, 5)
        w_ih = jax.random.uniform(k1, (3 * H, d_in), jnp.float32, -bound, bound)
        w_hh = jax.random.uniform(k2, (3 * H, H), jnp.float32, -bound, bound)
        b_ih = jax.random.uniform(k3, (3 * H,), jnp.float32, -bound, bound)
        b_hh = jax.random.uniform(k4, (3 * H,), jnp.float32, -bound, bound)
        if layer == 0:
            w_ih0 = w_ih.T.astype(weight_dtype)               # (D_in, 3H)
        else:
            w_ihr.append(w_ih.T.astype(weight_dtype))         # (H, 3H)
        w_hh_l.append(w_hh.T.astype(weight_dtype))            # (H, 3H)
        b_rz_l.append((b_ih[:2 * H] + b_hh[:2 * H]).reshape(1, -1))
        b_in_l.append(b_ih[2 * H:].reshape(1, -1))
        b_hn_l.append(b_hh[2 * H:].reshape(1, -1))
        d_in = H
    if not w_ihr:  # num_layers == 1: dummy block, never consumed.
        w_ihr.append(jnp.zeros((H, 3 * H), weight_dtype))
    return dict(
        w_ih0=w_ih0,                    # (D_in, 3H)          bf16
        w_ih_rest=jnp.stack(w_ihr),     # (max(L-1,1), H, 3H) bf16
        w_hh=jnp.stack(w_hh_l),         # (L, H, 3H)          bf16
        b_rz=jnp.stack(b_rz_l),         # (L, 1, 2H)          f32
        b_in=jnp.stack(b_in_l),         # (L, 1, H)           f32
        b_hn=jnp.stack(b_hn_l),         # (L, 1, H)           f32
    )


@jax.jit
def stacked_gru_forward(params, x, h0):
    """Equivalent of StackedGRU.forward in eval mode.

    x:  (B, input_size)
    h0: (num_layers, B, H)
    returns (out (B, H), h1 (L, B, H)) where out == h1[-1].
    """
    w_ih0 = params["w_ih0"]
    w_ihr = params["w_ih_rest"]
    w_hh = params["w_hh"]
    b_rz, b_in, b_hn = params["b_rz"], params["b_in"], params["b_hn"]
    L, H, threeH = w_hh.shape
    assert threeH == 3 * H
    Lh, B, Hh = h0.shape
    assert Lh == L and Hh == H
    D_in = x.shape[1]
    assert w_ih0.shape == (D_in, 3 * H)

    # Pad batch to the bf16 sublane tile (16).
    B_pad = max(16, ((B + 15) // 16) * 16)
    x_p = jnp.zeros((B_pad, D_in), jnp.bfloat16).at[:B].set(
        x.astype(jnp.bfloat16))
    h0_p = jnp.zeros((L, B_pad, H), jnp.float32).at[:, :B, :].set(
        h0.astype(jnp.float32))

    # Advisory cost estimate + explicit scoped-VMEM limit from block shapes.
    flops = 2 * B_pad * 3 * H * (D_in + (L - 1) * H + L * H)
    transcendentals = L * 3 * B_pad * H
    bytes_accessed = ((w_ih0.size + w_ihr.size + w_hh.size) * 2
                      + (b_rz.size + b_in.size + b_hn.size) * 4
                      + x_p.size * 2 + h0_p.size * 4 + L * B_pad * H * 4)
    blk_bytes = (
        2 * B_pad * D_in * 2          # x (bf16, resident)
        + 2 * D_in * 3 * H * 2        # W_ih layer 0 (bf16, resident)
        + 2 * B_pad * H * 4           # h0 block (f32, double-buffered)
        + 2 * 2 * H * 3 * H * 2       # W_ih rest + W_hh blocks (bf16, dbuf)
        + 2 * 4 * H * 4               # bias blocks (f32)
        + 2 * B_pad * H * 4           # h1 out block (f32)
        + B_pad * H * 2               # carry scratch (bf16)
        + B_pad * 3 * H * 4           # gx scratch (f32)
    )
    vmem_limit = int(min(max(2 * blk_bytes, 16 * 1024 * 1024),
                         100 * 1024 * 1024))

    h1_p = pl.pallas_call(
        _stacked_gru_kernel,
        out_shape=jax.ShapeDtypeStruct((L, B_pad, H), jnp.float32),
        grid_spec=pltpu.PrefetchScalarGridSpec(
            num_scalar_prefetch=0,
            grid=(L,),
            in_specs=[
                pl.BlockSpec((B_pad, D_in), lambda l: (0, 0)),          # x
                pl.BlockSpec((D_in, 3 * H), lambda l: (0, 0)),          # W_ih[0]
                pl.BlockSpec((1, B_pad, H), lambda l: (l, 0, 0)),       # h0[l]
                pl.BlockSpec((1, H, 3 * H),
                             lambda l: (jnp.maximum(l - 1, 0), 0, 0)),  # W_ih[l>=1]
                pl.BlockSpec((1, H, 3 * H), lambda l: (l, 0, 0)),       # W_hh[l]
                pl.BlockSpec((1, 1, 2 * H), lambda l: (l, 0, 0)),       # b_rz[l]
                pl.BlockSpec((1, 1, H), lambda l: (l, 0, 0)),           # b_in[l]
                pl.BlockSpec((1, 1, H), lambda l: (l, 0, 0)),           # b_hn[l]
            ],
            out_specs=pl.BlockSpec((1, B_pad, H), lambda l: (l, 0, 0)),  # h1[l]
            scratch_shapes=[
                pltpu.VMEM((B_pad, H), jnp.bfloat16),      # inter-layer carry
                pltpu.VMEM((B_pad, 3 * H), jnp.float32),   # input-side gates
            ]),
        compiler_params=pltpu.CompilerParams(
            dimension_semantics=("arbitrary",),   # layers are sequential
            vmem_limit_bytes=vmem_limit),
        cost_estimate=pl.CostEstimate(
            flops=flops, transcendentals=transcendentals,
            bytes_accessed=bytes_accessed),
    )(x_p, w_ih0, h0_p, w_ihr, w_hh, b_rz, b_in, b_hn)

    h1 = h1_p[:, :B, :].astype(x.dtype)
    return h1[-1], h1


def _reference_forward(params, x, h0):
    """Pure-JAX reference: torch.nn.GRUCell math with the same bf16-stored
    weights / bf16 matmul operands and f32 gate math."""
    L, H, _ = params["w_hh"].shape
    w_ih0 = params["w_ih0"]
    w_ihr = params["w_ih_rest"]
    w_hh = params["w_hh"]
    b_rz = params["b_rz"].astype(jnp.float32)
    b_in = params["b_in"].astype(jnp.float32)
    b_hn = params["b_hn"].astype(jnp.float32)
    inp = x
    hs = []
    for l in range(L):
        w_ih = w_ih0 if l == 0 else w_ihr[l - 1]
        gx = jnp.dot(inp.astype(jnp.bfloat16), w_ih,
                     preferred_element_type=jnp.float32)
        h_prev = h0[l].astype(jnp.float32)
        gh = jnp.dot(h_prev.astype(jnp.bfloat16), w_hh[l],
                     preferred_element_type=jnp.float32)
        rz = jax.nn.sigmoid(gx[:, :2 * H] + gh[:, :2 * H] + b_rz[l])
        r, z = rz[:, :H], rz[:, H:]
        n = jnp.tanh(gx[:, 2 * H:] + b_in[l] + r * (gh[:, 2 * H:] + b_hn[l]))
        h_new = n + z * (h_prev - n)
        inp = h_new
        hs.append(h_new)
    h1 = jnp.stack(hs)
    return h1[-1], h1


if __name__ == "__main__":
    num_layers = 3
    batch = 2
    input_size = 48     # != hidden_size, exercises the separate layer-0 W_ih
    hidden_size = 32

    key = jax.random.PRNGKey(0)
    k_params, k_x, k_h = jax.random.split(key, 3)

    params = init_stacked_gru_params(k_params, num_layers, input_size,
                                     hidden_size)
    x = jax.random.normal(k_x, (batch, input_size), jnp.float32)
    h0 = jax.random.normal(k_h, (num_layers, batch, hidden_size), jnp.float32)

    out, h1 = stacked_gru_forward(params, x, h0)
    jax.block_until_ready((out, h1))

    ref_out, ref_h1 = _reference_forward(params, x, h0)
    assert out.shape == (batch, hidden_size)
    assert h1.shape == (num_layers, batch, hidden_size)
    assert jnp.allclose(out, ref_out, atol=1e-4, rtol=1e-4), \
        float(jnp.max(jnp.abs(out - ref_out)))
    assert jnp.allclose(h1, ref_h1, atol=1e-4, rtol=1e-4), \
        float(jnp.max(jnp.abs(h1 - ref_h1)))

    print("KERNEL_OK")
</pallas_src>

<mosaic_0001>
module attributes {stable_mosaic.version = 11 : i64} {
  func.func @_stacked_gru_kernel(%arg0: i32, %arg1: memref<16x48xbf16, #tpu.memory_space<vmem>>, %arg2: memref<48x96xbf16, #tpu.memory_space<vmem>>, %arg3: memref<1x16x32xf32, #tpu.memory_space<vmem>>, %arg4: memref<1x32x96xbf16, #tpu.memory_space<vmem>>, %arg5: memref<1x32x96xbf16, #tpu.memory_space<vmem>>, %arg6: memref<1x1x64xf32, #tpu.memory_space<vmem>>, %arg7: memref<1x1x32xf32, #tpu.memory_space<vmem>>, %arg8: memref<1x1x32xf32, #tpu.memory_space<vmem>>, %arg9: memref<1x16x32xf32, #tpu.memory_space<vmem>>, %arg10: memref<16x32xbf16, #tpu.memory_space<vmem>>, %arg11: memref<16x96xf32, #tpu.memory_space<vmem>>) attributes {dimension_semantics = [#tpu.dimension_semantics<arbitrary>], iteration_bounds = array<i64: 3>, scalar_prefetch = 0 : i64, scratch_operands = 2 : i64, tpu.core_type = #tpu.core_type<tc>, window_params = [{pipeline_mode = #tpu.pipeline_mode<synchronous>, transform_indices = @transform_0, window_bounds = array<i64: 16, 48>}, {pipeline_mode = #tpu.pipeline_mode<synchronous>, transform_indices = @transform_1, window_bounds = array<i64: 48, 96>}, {transform_indices = @transform_2, window_bounds = array<i64: 1, 16, 32>}, {transform_indices = @transform_3, window_bounds = array<i64: 1, 32, 96>}, {transform_indices = @transform_4, window_bounds = array<i64: 1, 32, 96>}, {transform_indices = @transform_5, window_bounds = array<i64: 1, 1, 64>}, {transform_indices = @transform_6, window_bounds = array<i64: 1, 1, 32>}, {transform_indices = @transform_7, window_bounds = array<i64: 1, 1, 32>}, {transform_indices = @transform_8, window_bounds = array<i64: 1, 16, 32>}]} {
    %c0_i32 = arith.constant 0 : i32
    %0 = arith.cmpi eq, %arg0, %c0_i32 : i32
    %1 = arith.extui %0 : i1 to i32
    %c0_i32_0 = arith.constant 0 : i32
    %2 = arith.cmpi ne, %1, %c0_i32_0 : i32
    scf.if %2 {
      %c0_24 = arith.constant 0 : index
      %c0_25 = arith.constant 0 : index
      %50 = vector.load %arg1[%c0_24, %c0_25] : memref<16x48xbf16, #tpu.memory_space<vmem>>, vector<16x48xbf16>
      %c0_26 = arith.constant 0 : index
      %c0_27 = arith.constant 0 : index
      %51 = vector.load %arg2[%c0_26, %c0_27] : memref<48x96xbf16, #tpu.memory_space<vmem>>, vector<48x96xbf16>
      %cst_28 = arith.constant dense<0.000000e+00> : vector<16x96xf32>
      %52 = tpu.matmul %50, %51, %cst_28 {dimension_numbers = #tpu.dot_dimension_numbers<[1], [0], [0], [1], [0, 0, 1, 1], [], []>} : vector<16x48xbf16>, vector<48x96xbf16>, vector<16x96xf32> -> vector<16x96xf32>
      %c0_29 = arith.constant 0 : index
      %c0_30 = arith.constant 0 : index
      %53 = vector.load %arg11[%c0_29, %c0_30] : memref<16x96xf32, #tpu.memory_space<vmem>>, vector<16x96xf32>
      tpu.vector_store %arg11[%c0_29, %c0_30], %52 {strides = array<i32>} : memref<16x96xf32, #tpu.memory_space<vmem>>, vector<16x96xf32>,
    } else {
    }
    %c0_i32_1 = arith.constant 0 : i32
    %3 = arith.cmpi sgt, %arg0, %c0_i32_1 : i32
    %4 = arith.extui %3 : i1 to i32
    %c0_i32_2 = arith.constant 0 : i32
    %5 = arith.cmpi ne, %4, %c0_i32_2 : i32
    scf.if %5 {
      %c0_24 = arith.constant 0 : index
      %c0_25 = arith.constant 0 : index
      %50 = vector.load %arg10[%c0_24, %c0_25] : memref<16x32xbf16, #tpu.memory_space<vmem>>, vector<16x32xbf16>
      %c0_26 = arith.constant 0 : index
      %c0_27 = arith.constant 0 : index
      %c0_28 = arith.constant 0 : index
      %51 = vector.load %arg4[%c0_26, %c0_27, %c0_28] : memref<1x32x96xbf16, #tpu.memory_space<vmem>>, vector<1x32x96xbf16>
      %52 = vector.shape_cast %51 : vector<1x32x96xbf16> to vector<32x96xbf16>
      %cst_29 = arith.constant dense<0.000000e+00> : vector<16x96xf32>
      %53 = tpu.matmul %50, %52, %cst_29 {dimension_numbers = #tpu.dot_dimension_numbers<[1], [0], [0], [1], [0, 0, 1, 1], [], []>} : vector<16x32xbf16>, vector<32x96xbf16>, vector<16x96xf32> -> vector<16x96xf32>
      %c0_30 = arith.constant 0 : index
      %c0_31 = arith.constant 0 : index
      %54 = vector.load %arg11[%c0_30, %c0_31] : memref<16x96xf32, #tpu.memory_space<vmem>>, vector<16x96xf32>
      tpu.vector_store %arg11[%c0_30, %c0_31], %53 {strides = array<i32>} : memref<16x96xf32, #tpu.memory_space<vmem>>, vector<16x96xf32>,
    } else {
    }
    %c0 = arith.constant 0 : index
    %c0_3 = arith.constant 0 : index
    %c0_4 = arith.constant 0 : index
    %6 = vector.load %arg3[%c0, %c0_3, %c0_4] : memref<1x16x32xf32, #tpu.memory_space<vmem>>, vector<1x16x32xf32>
    %7 = vector.shape_cast %6 : vector<1x16x32xf32> to vector<16x32xf32>
    %8 = arith.truncf %7 : vector<16x32xf32> to vector<16x32xbf16>
    %c0_5 = arith.constant 0 : index
    %c0_6 = arith.constant 0 : index
    %c0_7 = arith.constant 0 : index
    %9 = vector.load %arg5[%c0_5, %c0_6, %c0_7] : memref<1x32x96xbf16, #tpu.memory_space<vmem>>, vector<1x32x96xbf16>
    %10 = vector.shape_cast %9 : vector<1x32x96xbf16> to vector<32x96xbf16>
    %cst = arith.constant dense<0.000000e+00> : vector<16x96xf32>
    %11 = tpu.matmul %8, %10, %cst {dimension_numbers = #tpu.dot_dimension_numbers<[1], [0], [0], [1], [0, 0, 1, 1], [], []>} : vector<16x32xbf16>, vector<32x96xbf16>, vector<16x96xf32> -> vector<16x96xf32>
    %c0_8 = arith.constant 0 : index
    %c0_9 = arith.constant 0 : index
    %12 = vector.load %arg11[%c0_8, %c0_9] : memref<16x96xf32, #tpu.memory_space<vmem>>, vector<16x96xf32>
    %13 = vector.extract_strided_slice %12 {offsets = [0, 0], sizes = [16, 64], strides = [1, 1]} : vector<16x96xf32> to vector<16x64xf32>
    %14 = vector.extract_strided_slice %11 {offsets = [0, 0], sizes = [16, 64], strides = [1, 1]} : vector<16x96xf32> to vector<16x64xf32>
    %15 = arith.addf %13, %14 : vector<16x64xf32>
    %c0_10 = arith.constant 0 : index
    %c0_11 = arith.constant 0 : index
    %c0_12 = arith.constant 0 : index
    %16 = vector.load %arg6[%c0_10, %c0_11, %c0_12] : memref<1x1x64xf32, #tpu.memory_space<vmem>>, vector<1x1x64xf32>
    %17 = vector.shape_cast %16 : vector<1x1x64xf32> to vector<1x64xf32>
    %18 = vector.broadcast %17 : vector<1x64xf32> to vector<16x64xf32>
    %19 = arith.addf %15, %18 : vector<16x64xf32>
    %20 = arith.negf %19 : vector<16x64xf32>
    %21 = math.exp %20 : vector<16x64xf32>
    %cst_13 = arith.constant 1.000000e+00 : f32
    %22 = vector.broadcast %cst_13 : f32 to vector<16x64xf32>
    %23 = arith.addf %22, %21 : vector<16x64xf32>
    %24 = arith.divf %22, %23 : vector<16x64xf32>
    %25 = vector.extract_strided_slice %24 {offsets = [0, 0], sizes = [16, 32], strides = [1, 1]} : vector<16x64xf32> to vector<16x32xf32>
    %26 = vector.extract_strided_slice %24 {offsets = [0, 32], sizes = [16, 32], strides = [1, 1]} : vector<16x64xf32> to vector<16x32xf32>
    %27 = vector.extract_strided_slice %12 {offsets = [0, 64], sizes = [16, 32], strides = [1, 1]} : vector<16x96xf32> to vector<16x32xf32>
    %c0_14 = arith.constant 0 : index
    %c0_15 = arith.constant 0 : index
    %c0_16 = arith.constant 0 : index
    %28 = vector.load %arg7[%c0_14, %c0_15, %c0_16] : memref<1x1x32xf32, #tpu.memory_space<vmem>>, vector<1x1x32xf32>
    %29 = vector.shape_cast %28 : vector<1x1x32xf32> to vector<1x32xf32>
    %30 = vector.broadcast %29 : vector<1x32xf32> to vector<16x32xf32>
    %31 = arith.addf %27, %30 : vector<16x32xf32>
    %32 = vector.extract_strided_slice %11 {offsets = [0, 64], sizes = [16, 32], strides = [1, 1]} : vector<16x96xf32> to vector<16x32xf32>
    %c0_17 = arith.constant 0 : index
    %c0_18 = arith.constant 0 : index
    %c0_19 = arith.constant 0 : index
    %33 = vector.load %arg8[%c0_17, %c0_18, %c0_19] : memref<1x1x32xf32, #tpu.memory_space<vmem>>, vector<1x1x32xf32>
    %34 = vector.shape_cast %33 : vector<1x1x32xf32> to vector<1x32xf32>
    %35 = vector.broadcast %34 : vector<1x32xf32> to vector<16x32xf32>
    %36 = arith.addf %32, %35 : vector<16x32xf32>
    %37 = arith.mulf %25, %36 : vector<16x32xf32>
    %38 = arith.addf %31, %37 : vector<16x32xf32>
    %39 = math.tanh %38 : vector<16x32xf32>
    %40 = arith.subf %7, %39 : vector<16x32xf32>
    %41 = arith.mulf %26, %40 : vector<16x32xf32>
    %42 = arith.addf %39, %41 : vector<16x32xf32>
    %c0_20 = arith.constant 0 : index
    %c0_21 = arith.constant 0 : index
    %c0_22 = arith.constant 0 : index
    %43 = vector.load %arg9[%c0_20, %c0_21, %c0_22] : memref<1x16x32xf32, #tpu.memory_space<vmem>>, vector<1x16x32xf32>
    %44 = vector.shape_cast %43 : vector<1x16x32xf32> to vector<16x32xf32>
    %45 = vector.shape_cast %42 : vector<16x32xf32> to vector<1x16x32xf32>
    tpu.vector_store %arg9[%c0_20, %c0_21, %c0_22], %45 {strides = array<i32>} : memref<1x16x32xf32, #tpu.memory_space<vmem>>, vector<1x16x32xf32>,
    %c1_i32 = arith.constant 1 : i32
    %46 = arith.addi %arg0, %c1_i32 : i32
    %c3_i32 = arith.constant 3 : i32
    %47 = arith.cmpi slt, %46, %c3_i32 : i32
    %48 = arith.extui %47 : i1 to i32
    %c0_i32_23 = arith.constant 0 : i32
    %49 = arith.cmpi ne, %48, %c0_i32_23 : i32
    scf.if %49 {
      %50 = arith.truncf %42 : vector<16x32xf32> to vector<16x32xbf16>
      %c0_24 = arith.constant 0 : index
      %c0_25 = arith.constant 0 : index
      %51 = vector.load %arg10[%c0_24, %c0_25] : memref<16x32xbf16, #tpu.memory_space<vmem>>, vector<16x32xbf16>
      tpu.vector_store %arg10[%c0_24, %c0_25], %50 {strides = array<i32>} : memref<16x32xbf16, #tpu.memory_space<vmem>>, vector<16x32xbf16>,
    } else {
    }
    return
  }
  func.func @transform_0(%arg0: i32) -> (i32, i32) {
    %c0_i32 = arith.constant 0 : i32
    %c0_i32_0 = arith.constant 0 : i32
    %c0_i32_1 = arith.constant 0 : i32
    return %c0_i32, %c0_i32_0 : i32, i32
  }
  func.func @transform_1(%arg0: i32) -> (i32, i32) {
    %c0_i32 = arith.constant 0 : i32
    %c0_i32_0 = arith.constant 0 : i32
    %c0_i32_1 = arith.constant 0 : i32
    return %c0_i32, %c0_i32_0 : i32, i32
  }
  func.func @transform_2(%arg0: i32) -> (i32, i32, i32) {
    %c0_i32 = arith.constant 0 : i32
    %c0_i32_0 = arith.constant 0 : i32
    %c0_i32_1 = arith.constant 0 : i32
    return %arg0, %c0_i32, %c0_i32_0 : i32, i32, i32
  }
  func.func @transform_3(%arg0: i32) -> (i32, i32, i32) {
    %c1_i32 = arith.constant 1 : i32
    %0 = arith.subi %arg0, %c1_i32 : i32
    %c0_i32 = arith.constant 0 : i32
    %1 = arith.maxsi %0, %c0_i32 : i32
    %c0_i32_0 = arith.constant 0 : i32
    %c0_i32_1 = arith.constant 0 : i32
    %c0_i32_2 = arith.constant 0 : i32
    return %1, %c0_i32_0, %c0_i32_1 : i32, i32, i32
  }
  func.func @transform_4(%arg0: i32) -> (i32, i32, i32) {
    %c0_i32 = arith.constant 0 : i32
    %c0_i32_0 = arith.constant 0 : i32
    %c0_i32_1 = arith.constant 0 : i32
    return %arg0, %c0_i32, %c0_i32_0 : i32, i32, i32
  }
  func.func @transform_5(%arg0: i32) -> (i32, i32, i32) {
    %c0_i32 = arith.constant 0 : i32
    %c0_i32_0 = arith.constant 0 : i32
    %c0_i32_1 = arith.constant 0 : i32
    return %arg0, %c0_i32, %c0_i32_0 : i32, i32, i32
  }
  func.func @transform_6(%arg0: i32) -> (i32, i32, i32) {
    %c0_i32 = arith.constant 0 : i32
    %c0_i32_0 = arith.constant 0 : i32
    %c0_i32_1 = arith.constant 0 : i32
    return %arg0, %c0_i32, %c0_i32_0 : i32, i32, i32
  }
  func.func @transform_7(%arg0: i32) -> (i32, i32, i32) {
    %c0_i32 = arith.constant 0 : i32
    %c0_i32_0 = arith.constant 0 : i32
    %c0_i32_1 = arith.constant 0 : i32
    return %arg0, %c0_i32, %c0_i32_0 : i32, i32, i32
  }
  func.func @transform_8(%arg0: i32) -> (i32, i32, i32) {
    %c0_i32 = arith.constant 0 : i32
    %c0_i32_0 = arith.constant 0 : i32
    %c0_i32_1 = arith.constant 0 : i32
    return %arg0, %c0_i32, %c0_i32_0 : i32, i32, i32
  }
}

</mosaic_0001>

<llo_original>
// kernel: stacked_gru_forward.1
$region0: #{stacked_gru_forward.1}
  #allocation0 [shape = 'u32[]', space=smem, size = 0x4, offset = 0x4, fixed_abs, tag = 'smem constant byte address 0x4 - core index']
  #allocation1 [shape = 'u32[72,128]{1,0:T(1,128)}', space=vmem, size = 0x9000, scoped, tag = 'internal scratch']
  #allocation2 [shape = 'bf16[16,32]{1,0:T(8,128)(2,1)}', space=vmem, size = 0x1000, scoped, tag = 'scratch operand']
  #allocation3 [shape = 'f32[16,96]{1,0:T(8,128)}', space=vmem, size = 0x2000, scoped, tag = 'scratch operand']
  %s0 = inlined_call_operand.vmem [shape: bf16[16,48], index: 0, kind: input, shape index: {}]
  %s1 = inlined_call_operand.hbm [shape: bf16[48,96], index: 1, kind: input, shape index: {}]
  %s2 = inlined_call_operand.vmem [shape: f32[3,16,32], index: 2, kind: input, shape index: {}]
  %s3 = inlined_call_operand.hbm [shape: bf16[2,32,96], index: 3, kind: input, shape index: {}]
  %s4 = inlined_call_operand.vmem [shape: bf16[3,32,96], index: 4, kind: input, shape index: {}]
  %s5 = inlined_call_operand.vmem [shape: f32[3,1,64], index: 5, kind: input, shape index: {}]
  %s6 = inlined_call_operand.vmem [shape: f32[3,1,32], index: 6, kind: input, shape index: {}]
  %s7 = inlined_call_operand.vmem [shape: f32[3,1,32], index: 7, kind: input, shape index: {}]
  %s8 = inlined_call_operand.vmem [shape: f32[3,16,32], index: 8, kind: output, shape index: {}]
  %s9 = sld [smem:[#allocation0]]
  $region85: #{stacked_gru_forward.1} parent=0
    _
  %s11 = ssub.s32 1, %s9
  %s12 = scalar_select 0, %s11, %s9
  $region1: #{stacked_gru_forward.1} parent=0
    #allocation4 [shape = 'u8[12288]{0}', space=vmem, size = 0x3000, scoped, tag = 'input window, operand 1, single buffered']
    #allocation5 [shape = 's32[2]{0}', space=sflag, size = 0x8, scoped, tag = 'scoped memory for stacked_gru_forward.1']
    #allocation6 [shape = 'u8[16384]{0}', space=vmem, size = 0x4000, scoped, tag = 'input window, operand 3']
    #allocation7 [shape = 's32[2]{0}', space=sflag, size = 0x8, scoped, tag = 'scoped memory for stacked_gru_forward.1']
    %13 = vsyncpa [#allocation5], 0
    %14 = vsyncpa [#allocation7], 0
    %s15 = scalar_lea.sflag [#allocation7], 1
    %16 = vsyncpa %s15, 0
    loop: start=0, step=1, limit=5
    $region2: #{stacked_gru_forward.1} parent=1 // loop_pre_header
      _
    $region3: #{stacked_gru_forward.1} parent=1 // loop_header
      %s18 = sphi 0, %s22
      %p19 = scmp.ge.s32.totalorder %s18, 5
      %s26 = sphi 0, %s26
      %s28 = sphi 0, %s26
      %s29 = sphi 0, %s28
      %s43 = sphi 0, %s29
      %s47 = sphi 0, %s47
      %s49 = sphi 0, %s47
      %s50 = sphi 0, %s49
      %s64 = sphi 0, %s50
      %s70 = sphi 0, %s72
      %s73 = sphi 0, %s70
      %s74 = sphi 0, %s73
      %s90 = sphi 0, %s74
      %s102 = sphi 0, %s104
      %s105 = sphi 0, %s102
      %s106 = sphi 0, %s105
      %s122 = sphi 0, %s106
      %s128 = sphi 0, %s130
      %s131 = sphi 0, %s128
      %s132 = sphi 0, %s131
      %s148 = sphi 0, %s132
      %s154 = sphi 0, %s156
      %s157 = sphi 0, %s154
      %s158 = sphi 0, %s157
      %s174 = sphi 0, %s158
      %s180 = sphi 0, %s182
      %s183 = sphi 0, %s180
      %s184 = sphi 0, %s183
      %s200 = sphi 0, %s184
      %s206 = sphi 0, %s208
      %s209 = sphi 0, %s206
      %s210 = sphi 0, %s209
      %s226 = sphi 0, %s210
      %s232 = sphi 0, %s234
      %s235 = sphi 0, %s232
      %s236 = sphi 0, %s235
      %s252 = sphi 0, %s236
    $region4: #{stacked_gru_forward.1} parent=1 // loop_header_branch
      %21 = sbr.rel (%p19) target = $region8
    $region5: #{stacked_gru_forward.1} parent=1 // loop_body
      %s23 = ssub.s32 %s18, 1
      %s24 = ssub.s32 %s18, 2
      %s25 = sadd.s32 %s18, 1
      %s27 = sadd.s32 %s26, 1
      %p30 = scmp.eq.s32.totalorder %s18, 2
      %p31 = scmp.ne.s32.totalorder %s26, %s28
      %p32 = scmp.eq.s32.totalorder %s18, 0
      %p33 = por %p31, %p32
      %p34 = scmp.ne.s32.totalorder %s26, %s28
      %p35 = scmp.eq.s32.totalorder %s23, 2
      %p36 = por %p34, %p35
      %p37 = scmp.ne.s32.totalorder %s28, %s29
      %p38 = scmp.eq.s32.totalorder %s23, 0
      %p39 = por %p37, %p38
      %p40 = scmp.ne.s32.totalorder %s28, %s29
      %p41 = scmp.eq.s32.totalorder %s24, 2
      %p42 = por %p40, %p41
      %p44 = scmp.ne.s32.totalorder %s29, %s43
      %p45 = scmp.eq.s32.totalorder %s24, 0
      %p46 = por %p44, %p45
      %s48 = sadd.s32 %s47, 1
      %p51 = scmp.eq.s32.totalorder %s18, 2
      %p52 = scmp.ne.s32.totalorder %s47, %s49
      %p53 = scmp.eq.s32.totalorder %s18, 0
      %p54 = por %p52, %p53
      %p55 = scmp.ne.s32.totalorder %s47, %s49
      %p56 = scmp.eq.s32.totalorder %s23, 2
      %p57 = por %p55, %p56
      %p58 = scmp.ne.s32.totalorder %s49, %s50
      %p59 = scmp.eq.s32.totalorder %s23, 0
      %p60 = por %p58, %p59
      %p61 = scmp.ne.s32.totalorder %s49, %s50
      %p62 = scmp.eq.s32.totalorder %s24, 2
      %p63 = por %p61, %p62
      %p65 = scmp.ne.s32.totalorder %s50, %s64
      %p66 = scmp.eq.s32.totalorder %s24, 0
      %p67 = por %p65, %p66
      %s68 = ssub.s32 %s18, %s25
      %p69 = scmp.eq.s32.totalorder %s68, 0
      %s71 = sadd.s32 %s70, 1
      %s72 = scalar_select %p69, %s70, %s71
      %p75 = pneg %p69
      %p76 = scmp.eq.s32.totalorder %s18, 2
      %p77 = por %p75, %p76
      %p78 = scmp.ne.s32.totalorder %s70, %s73
      %p79 = scmp.eq.s32.totalorder %s18, 0
      %p80 = por %p78, %p79
      %p81 = scmp.ne.s32.totalorder %s70, %s73
      %p82 = scmp.eq.s32.totalorder %s23, 2
      %p83 = por %p81, %p82
      %p84 = scmp.ne.s32.totalorder %s73, %s74
      %p85 = scmp.eq.s32.totalorder %s23, 0
      %p86 = por %p84, %p85
      %p87 = scmp.ne.s32.totalorder %s73, %s74
      %p88 = scmp.eq.s32.totalorder %s24, 2
      %p89 = por %p87, %p88
      %p91 = scmp.ne.s32.totalorder %s74, %s90
      %p92 = scmp.eq.s32.totalorder %s24, 0
      %p93 = por %p91, %p92
      %s94 = ssub.s32 %s18, 1
      %p95 = scmp.gt.s32.totalorder %s94, 0
      %s96 = scalar_select %p95, %s94, 0
      %s97 = ssub.s32 %s25, 1
      %p98 = scmp.gt.s32.totalorder %s97, 0
      %s99 = scalar_select %p98, %s97, 0
      %s100 = ssub.s32 %s96, %s99
      %p101 = scmp.eq.s32.totalorder %s100, 0
      %s103 = sadd.s32 %s102, 1
      %s104 = scalar_select %p101, %s102, %s103
      %p107 = pneg %p101
      %p108 = scmp.eq.s32.totalorder %s18, 2
      %p109 = por %p107, %p108
      %p110 = scmp.ne.s32.totalorder %s102, %s105
      %p111 = scmp.eq.s32.totalorder %s18, 0
      %p112 = por %p110, %p111
      %p113 = scmp.ne.s32.totalorder %s102, %s105
      %p114 = scmp.eq.s32.totalorder %s23, 2
      %p115 = por %p113, %p114
      %p116 = scmp.ne.s32.totalorder %s105, %s106
      %p117 = scmp.eq.s32.totalorder %s23, 0
      %p118 = por %p116, %p117
      %p119 = scmp.ne.s32.totalorder %s105, %s106
      %p120 = scmp.eq.s32.totalorder %s24, 2
      %p121 = por %p119, %p120
      %p123 = scmp.ne.s32.totalorder %s106, %s122
      %p124 = scmp.eq.s32.totalorder %s24, 0
      %p125 = por %p123, %p124
      %s126 = ssub.s32 %s18, %s25
      %p127 = scmp.eq.s32.totalorder %s126, 0
      %s129 = sadd.s32 %s128, 1
      %s130 = scalar_select %p127, %s128, %s129
      %p133 = pneg %p127
      %p134 = scmp.eq.s32.totalorder %s18, 2
      %p135 = por %p133, %p134
      %p136 = scmp.ne.s32.totalorder %s128, %s131
      %p137 = scmp.eq.s32.totalorder %s18, 0
      %p138 = por %p136, %p137
      %p139 = scmp.ne.s32.totalorder %s128, %s131
      %p140 = scmp.eq.s32.totalorder %s23, 2
      %p141 = por %p139, %p140
      %p142 = scmp.ne.s32.totalorder %s131, %s132
      %p143 = scmp.eq.s32.totalorder %s23, 0
      %p144 = por %p142, %p143
      %p145 = scmp.ne.s32.totalorder %s131, %s132
      %p146 = scmp.eq.s32.totalorder %s24, 2
      %p147 = por %p145, %p146
      %p149 = scmp.ne.s32.totalorder %s132, %s148
      %p150 = scmp.eq.s32.totalorder %s24, 0
      %p151 = por %p149, %p150
      %s152 = ssub.s32 %s18, %s25
      %p153 = scmp.eq.s32.totalorder %s152, 0
      %s155 = sadd.s32 %s154, 1
      %s156 = scalar_select %p153, %s154, %s155
      %p159 = pneg %p153
      %p160 = scmp.eq.s32.totalorder %s18, 2
      %p161 = por %p159, %p160
      %p162 = scmp.ne.s32.totalorder %s154, %s157
      %p163 = scmp.eq.s32.totalorder %s18, 0
      %p164 = por %p162, %p163
      %p165 = scmp.ne.s32.totalorder %s154, %s157
      %p166 = scmp.eq.s32.totalorder %s23, 2
      %p167 = por %p165, %p166
      %p168 = scmp.ne.s32.totalorder %s157, %s158
      %p169 = scmp.eq.s32.totalorder %s23, 0
      %p170 = por %p168, %p169
      %p171 = scmp.ne.s32.totalorder %s157, %s158
      %p172 = scmp.eq.s32.totalorder %s24, 2
      %p173 = por %p171, %p172
      %p175 = scmp.ne.s32.totalorder %s158, %s174
      %p176 = scmp.eq.s32.totalorder %s24, 0
      %p177 = por %p175, %p176
      %s178 = ssub.s32 %s18, %s25
      %p179 = scmp.eq.s32.totalorder %s178, 0
      %s181 = sadd.s32 %s180, 1
      %s182 = scalar_select %p179, %s180, %s181
      %p185 = pneg %p179
      %p186 = scmp.eq.s32.totalorder %s18, 2
      %p187 = por %p185, %p186
      %p188 = scmp.ne.s32.totalorder %s180, %s183
      %p189 = scmp.eq.s32.totalorder %s18, 0
      %p190 = por %p188, %p189
      %p191 = scmp.ne.s32.totalorder %s180, %s183
      %p192 = scmp.eq.s32.totalorder %s23, 2
      %p193 = por %p191, %p192
      %p194 = scmp.ne.s32.totalorder %s183, %s184
      %p195 = scmp.eq.s32.totalorder %s23, 0
      %p196 = por %p194, %p195
      %p197 = scmp.ne.s32.totalorder %s183, %s184
      %p198 = scmp.eq.s32.totalorder %s24, 2
      %p199 = por %p197, %p198
      %p201 = scmp.ne.s32.totalorder %s184, %s200
      %p202 = scmp.eq.s32.totalorder %s24, 0
      %p203 = por %p201, %p202
      %s204 = ssub.s32 %s18, %s25
      %p205 = scmp.eq.s32.totalorder %s204, 0
      %s207 = sadd.s32 %s206, 1
      %s208 = scalar_select %p205, %s206, %s207
      %p211 = pneg %p205
      %p212 = scmp.eq.s32.totalorder %s18, 2
      %p213 = por %p211, %p212
      %p214 = scmp.ne.s32.totalorder %s206, %s209
      %p215 = scmp.eq.s32.totalorder %s18, 0
      %p216 = por %p214, %p215
      %p217 = scmp.ne.s32.totalorder %s206, %s209
      %p218 = scmp.eq.s32.totalorder %s23, 2
      %p219 = por %p217, %p218
      %p220 = scmp.ne.s32.totalorder %s209, %s210
      %p221 = scmp.eq.s32.totalorder %s23, 0
      %p222 = por %p220, %p221
      %p223 = scmp.ne.s32.totalorder %s209, %s210
      %p224 = scmp.eq.s32.totalorder %s24, 2
      %p225 = por %p223, %p224
      %p227 = scmp.ne.s32.totalorder %s210, %s226
      %p228 = scmp.eq.s32.totalorder %s24, 0
      %p229 = por %p227, %p228
      %s230 = ssub.s32 %s18, %s25
      %p231 = scmp.eq.s32.totalorder %s230, 0
      %s233 = sadd.s32 %s232, 1
      %s234 = scalar_select %p231, %s232, %s233
      %p237 = pneg %p231
      %p238 = scmp.eq.s32.totalorder %s18, 2
      %p239 = por %p237, %p238
      %p240 = scmp.ne.s32.totalorder %s232, %s235
      %p241 = scmp.eq.s32.totalorder %s18, 0
      %p242 = por %p240, %p241
      %p243 = scmp.ne.s32.totalorder %s232, %s235
      %p244 = scmp.eq.s32.totalorder %s23, 2
      %p245 = por %p243, %p244
      %p246 = scmp.ne.s32.totalorder %s235, %s236
      %p247 = scmp.eq.s32.totalorder %s23, 0
      %p248 = por %p246, %p247
      %p249 = scmp.ne.s32.totalorder %s235, %s236
      %p250 = scmp.eq.s32.totalorder %s24, 2
      %p251 = por %p249, %p250
      %p253 = scmp.ne.s32.totalorder %s236, %s252
      %p254 = scmp.eq.s32.totalorder %s24, 0
      %p255 = por %p253, %p254
      %p256 = scmp.le.s32.totalorder 1, %s18
      %p257 = scmp.lt.s32.totalorder %s18, 4
      %p258 = pnand %p256, %p257
      %p259 = pneg %p258
      // Predicated region
      $region9: #{stacked_gru_forward.1} parent=5 // pred_check
        _
      $region10: #{stacked_gru_forward.1} parent=5 // pred_check_branch
        %261 = sbr.rel (%p258) target = $region12
      $region11: #{stacked_gru_forward.1} parent=5 // pred_region
        %s262 = ssub.s32 %s18, 1
        // Predicated region
        $region13: #{stacked_gru_forward.1} parent=11 // pred_check
          %p263 = pneg %p39
        $region14: #{stacked_gru_forward.1} parent=11 // pred_check_branch
          %265 = sbr.rel (%p263) target = $region16
        $region15: #{stacked_gru_forward.1} parent=11 // pred_region
          _
        $region16: #{stacked_gru_forward.1} parent=11 // pred_fallthru
          _
        // Predicated region
        $region17: #{stacked_gru_forward.1} parent=11 // pred_check
          %p266 = pneg %p60
        $region18: #{stacked_gru_forward.1} parent=11 // pred_check_branch
          %268 = sbr.rel (%p266) target = $region20
        $region19: #{stacked_gru_forward.1} parent=11 // pred_region
          %270 = vsyncadd [#allocation5], 0
          %s271 = sshll.u32 %s1, 4
          %s272 = int_to_ptr.hbm [resolvable:$true] %s271
          %s273 = sshll.u32 [#allocation4], 4
          %s274 = int_to_ptr.vmem [resolvable:$true] %s273
          %279 = dma.hbm_to_vmem [thread:$0]  %s272, 384, %s274, [#allocation5], 64, 64, 4
        $region20: #{stacked_gru_forward.1} parent=11 // pred_fallthru
          _
      $region12: #{stacked_gru_forward.1} parent=5 // pred_fallthru
        _
      %p280 = scmp.lt.s32.totalorder %s18, 3
      // Predicated region
      $region21: #{stacked_gru_forward.1} parent=5 // pred_check
        %p281 = pneg %p280
      $region22: #{stacked_gru_forward.1} parent=5 // pred_check_branch
        %283 = sbr.rel (%p281) target = $region24
      $region23: #{stacked_gru_forward.1} parent=5 // pred_region
        // Predicated region
        $region25: #{stacked_gru_forward.1} parent=23 // pred_check
          %p284 = pneg %p80
        $region26: #{stacked_gru_forward.1} parent=23 // pred_check_branch
          %286 = sbr.rel (%p284) target = $region28
        $region27: #{stacked_gru_forward.1} parent=23 // pred_region
          %p287 = scmp.lt.s32.totalorder %s18, 2
          %s288 = scalar_select %p287, %s18, 2
          %s289 = smul.addr %s288, 2
          %s290 = smul.addr %s289, 8
          %s291 = scalar_lea.vmem %s2, %s290
        $region28: #{stacked_gru_forward.1} parent=23 // pred_fallthru
          _
        // Predicated region
        $region29: #{stacked_gru_forward.1} parent=23 // pred_check
          %p292 = pneg %p112
        $region30: #{stacked_gru_forward.1} parent=23 // pred_check_branch
          %294 = sbr.rel (%p292) target = $region32
        $region31: #{stacked_gru_forward.1} parent=23 // pred_region
          %s295 = sand.u32 %s102, 1
          %s296 = scalar_lea.sflag [#allocation7], %s295
          %s297 = sand.u32 %s102, 1
          %s298 = smul.addr %s297, 16
          %s299 = scalar_lea.vmem [#allocation6], %s298
          %s300 = ssub.s32 %s18, 1
          %p301 = scmp.gt.s32.totalorder %s300, 0
          %s302 = scalar_select %p301, %s300, 0
          %304 = vsyncadd %s296, 0
          %s305 = smul.addr %s302, 4
          %s306 = smul.addr %s305, 4
          %s307 = scalar_lea.hbm %s3, %s306
          %s308 = sshll.u32 %s307, 4
          %s309 = int_to_ptr.hbm [resolvable:$true] %s308
          %s310 = sshll.u32 %s299, 4
          %s311 = int_to_ptr.vmem [resolvable:$true] %s310
          %316 = dma.hbm_to_vmem [thread:$0]  %s309, 256, %s311, %s296, 64, 64, 4
        $region32: #{stacked_gru_forward.1} parent=23 // pred_fallthru
          _
        // Predicated region
        $region33: #{stacked_gru_forward.1} parent=23 // pred_check
          %p317 = pneg %p138
        $region34: #{stacked_gru_forward.1} parent=23 // pred_check_branch
          %319 = sbr.rel (%p317) target = $region36
        $region35: #{stacked_gru_forward.1} parent=23 // pred_region
          %p320 = scmp.lt.s32.totalorder %s18, 2
          %s321 = scalar_select %p320, %s18, 2
          %s322 = smul.addr %s321, 4
          %s323 = smul.addr %s322, 4
          %s324 = scalar_lea.vmem %s4, %s323
        $region36: #{stacked_gru_forward.1} parent=23 // pred_fallthru
          _
        // Predicated region
        $region37: #{stacked_gru_forward.1} parent=23 // pred_check
          %p325 = pneg %p164
        $region38: #{stacked_gru_forward.1} parent=23 // pred_check_branch
          %327 = sbr.rel (%p325) target = $region40
        $region39: #{stacked_gru_forward.1} parent=23 // pred_region
          %p328 = scmp.lt.s32.totalorder %s18, 2
          %s329 = scalar_select %p328, %s18, 2
          %s330 = scalar_lea.vmem %s5, %s329
        $region40: #{stacked_gru_forward.1} parent=23 // pred_fallthru
          _
        // Predicated region
        $region41: #{stacked_gru_forward.1} parent=23 // pred_check
          %p331 = pneg %p190
        $region42: #{stacked_gru_forward.1} parent=23 // pred_check_branch
          %333 = sbr.rel (%p331) target = $region44
        $region43: #{stacked_gru_forward.1} parent=23 // pred_region
          %p334 = scmp.lt.s32.totalorder %s18, 2
          %s335 = scalar_select %p334, %s18, 2
          %s336 = scalar_lea.vmem %s6, %s335
        $region44: #{stacked_gru_forward.1} parent=23 // pred_fallthru
          _
        // Predicated region
        $region45: #{stacked_gru_forward.1} parent=23 // pred_check
          %p337 = pneg %p216
        $region46: #{stacked_gru_forward.1} parent=23 // pred_check_branch
          %339 = sbr.rel (%p337) target = $region48
        $region47: #{stacked_gru_forward.1} parent=23 // pred_region
          %p340 = scmp.lt.s32.totalorder %s18, 2
          %s341 = scalar_select %p340, %s18, 2
          %s342 = scalar_lea.vmem %s7, %s341
        $region48: #{stacked_gru_forward.1} parent=23 // pred_fallthru
          _
      $region24: #{stacked_gru_forward.1} parent=5 // pred_fallthru
        _
      %p343 = scmp.le.s32.totalorder 1, %s18
      %p344 = scmp.lt.s32.totalorder %s18, 4
      %p345 = pnand %p343, %p344
      %p346 = pneg %p345
      // Predicated region
      $region49: #{stacked_gru_forward.1} parent=5 // pred_check
        _
      $region50: #{stacked_gru_forward.1} parent=5 // pred_check_branch
        %348 = sbr.rel (%p345) target = $region52
      $region51: #{stacked_gru_forward.1} parent=5 // pred_region
        %s349 = ssub.s32 %s18, 1
        // Predicated region
        $region53: #{stacked_gru_forward.1} parent=51 // pred_check
          %p350 = pneg %p60
        $region54: #{stacked_gru_forward.1} parent=51 // pred_check_branch
          %352 = sbr.rel (%p350) target = $region56
        $region55: #{stacked_gru_forward.1} parent=51 // pred_region
          %354 = dma.done [#allocation5], 384
        $region56: #{stacked_gru_forward.1} parent=51 // pred_fallthru
          _
        %s355 = sand.u32 %s105, 1
        %s356 = scalar_lea.sflag [#allocation7], %s355
        %s357 = sand.u32 %s105, 1
        %s358 = smul.addr %s357, 16
        %s359 = scalar_lea.vmem [#allocation6], %s358
        // Predicated region
        $region57: #{stacked_gru_forward.1} parent=51 // pred_check
          %p360 = pneg %p118
        $region58: #{stacked_gru_forward.1} parent=51 // pred_check_branch
          %362 = sbr.rel (%p360) target = $region60
        $region59: #{stacked_gru_forward.1} parent=51 // pred_region
          %364 = dma.done %s356, 256
        $region60: #{stacked_gru_forward.1} parent=51 // pred_fallthru
          _
        %p365 = pneg %p39
        %p366 = pneg %p36
        %p367 = pneg %p60
        %p368 = pneg %p57
        %p369 = scmp.lt.s32.totalorder %s23, 2
        %s370 = scalar_select %p369, %s23, 2
        %s371 = smul.addr %s370, 2
        %s372 = smul.addr %s371, 8
        %s373 = scalar_lea.vmem %s2, %s372
        %p374 = pneg %p86
        %p375 = pneg %p83
        %s376 = sand.u32 %s105, 1
        %s377 = scalar_lea.sflag [#allocation7], %s376
        %s378 = sand.u32 %s105, 1
        %s379 = smul.addr %s378, 16
        %s380 = scalar_lea.vmem [#allocation6], %s379
        %p381 = pneg %p118
        %p382 = pneg %p115
        %p383 = scmp.lt.s32.totalorder %s23, 2
        %s384 = scalar_select %p383, %s23, 2
        %s385 = smul.addr %s384, 4
        %s386 = smul.addr %s385, 4
        %s387 = scalar_lea.vmem %s4, %s386
        %p388 = pneg %p144
        %p389 = pneg %p141
        %p390 = scmp.lt.s32.totalorder %s23, 2
        %s391 = scalar_select %p390, %s23, 2
        %s392 = scalar_lea.vmem %s5, %s391
        %p393 = pneg %p170
        %p394 = pneg %p167
        %p395 = scmp.lt.s32.totalorder %s23, 2
        %s396 = scalar_select %p395, %s23, 2
        %s397 = scalar_lea.vmem %s6, %s396
        %p398 = pneg %p196
        %p399 = pneg %p193
        %p400 = scmp.lt.s32.totalorder %s23, 2
        %s401 = scalar_select %p400, %s23, 2
        %s402 = scalar_lea.vmem %s7, %s401
        %p403 = pneg %p222
        %p404 = pneg %p219
        %p405 = pneg %p248
        %p406 = pneg %p245
        %p407 = scmp.lt.s32.totalorder %s23, 2
        %s408 = scalar_select %p407, %s23, 2
        %s409 = smul.addr %s408, 2
        %s410 = smul.addr %s409, 8
        %s411 = scalar_lea.vmem %s8, %s410
        %p412 = scmp.lt.s32.totalorder %s23, 2
        %s413 = scalar_select %p412, %s23, 2
        %s414 = smul.addr %s413, 2
        %s415 = smul.addr %s414, 8
        %s416 = scalar_lea.vmem %s2, %s415
        %s417 = ssub.s32 %s23, 1
        %p418 = scmp.gt.s32.totalorder %s417, 0
        %s419 = scalar_select %p418, %s417, 0
        %p420 = scmp.lt.s32.totalorder %s23, 2
        %s421 = scalar_select %p420, %s23, 2
        %s422 = smul.addr %s421, 4
        %s423 = smul.addr %s422, 4
        %s424 = scalar_lea.vmem %s4, %s423
        %p425 = scmp.lt.s32.totalorder %s23, 2
        %s426 = scalar_select %p425, %s23, 2
        %s427 = scalar_lea.vmem %s5, %s426
        %p428 = scmp.lt.s32.totalorder %s23, 2
        %s429 = scalar_select %p428, %s23, 2
        %s430 = scalar_lea.vmem %s6, %s429
        %p431 = scmp.lt.s32.totalorder %s23, 2
        %s432 = scalar_select %p431, %s23, 2
        %s433 = scalar_lea.vmem %s7, %s432
        %p434 = scmp.lt.s32.totalorder %s23, 2
        %s435 = scalar_select %p434, %s23, 2
        %s436 = smul.addr %s435, 2
        %s437 = smul.addr %s436, 8
        %s438 = scalar_lea.vmem %s8, %s437
        %p440 = scmp.eq.s32.totalorder %s23, 0
        // Predicated region
        $region61: #{stacked_gru_forward.1} parent=51 // pred_check
          %p441 = pneg %p440
        $region62: #{stacked_gru_forward.1} parent=51 // pred_check_branch
          %443 = sbr.rel (%p441) target = $region64
        $region63: #{stacked_gru_forward.1} parent=51 // pred_region
          %v444 = vld [vmem:[%s0] sm:$0xf]
          %v445 = vld [vmem:[%s0 + $0x4] sm:$0xf]
          %v446 = vld [vmem:[#allocation4] sm:$0xf]
          %v447 = vld [vmem:[#allocation4 + $0x4] sm:$0xf]
          %v448 = vld [vmem:[#allocation4 + $0x8] sm:$0xf]
          %v449 = vld [vmem:[#allocation4 + $0xc] sm:$0xf]
          %v450 = vld [vmem:[#allocation4 + $0x10] sm:$0xf]
          %v451 = vld [vmem:[#allocation4 + $0x14] sm:$0xf]
          %v454 = vunpack.c.l.b16 %v444
          %v455 = vunpack.c.l.b16 %v445
          %v456 = vpack.c.b16 %v455, %v454
          %v463 = vunpack.c.l.b16 %v446
          %v464 = vunpack.c.l.b16 %v447
          %v465 = vunpack.c.l.b16 %v448
          %v466 = vunpack.c.l.b16 %v449
          %v467 = vunpack.c.l.b16 %v450
          %v468 = vunpack.c.l.b16 %v451
          %v469 = vpack.c.b16 %v464, %v463
          %v470 = vpack.c.b16 %v466, %v465
          %v471 = vpack.c.b16 %v468, %v467
          %vm475 = vcmask 392192
          %v477 = vsel %vm475, %v456, 0
          %479 = vmatpush.bf16.msra.mxu0 0
          %480 = vmatpush.bf16.msra.mxu0 0
          %481 = vmatpush.bf16.msra.mxu0 0
          %482 = vmatpush.bf16.msra.mxu0 0
          %483 = vmatpush.bf16.msra.mxu0 0
          %484 = vmatpush.bf16.msra.mxu0 %v471
          %485 = vmatpush.bf16.msra.mxu0 %v470
          %486 = vmatpush.bf16.msra.mxu0 %v469
          %487 = vmatmul.bf16.gmra.mxu0 %v477
          %v488 = vpop.f32.mrf.mxu0
          %v489 = vadd.f32 0.0, %v488
          %v490 = vpop.f32.mrf.mxu0
          %v491 = vadd.f32 0.0, %v490
          %492 = vdwg.mxu0
          %vm493 = vcmask 785408
          %494 = vst.msk [vmem:[#allocation3] sm:$0xff] %vm493, %v489
          %495 = vst.msk [vmem:[#allocation3 + $0x8] sm:$0xff] %vm493, %v491
        $region64: #{stacked_gru_forward.1} parent=51 // pred_fallthru
          _
        %p496 = scmp.gt.s32.totalorder %s23, 0
        // Predicated region
        $region65: #{stacked_gru_forward.1} parent=51 // pred_check
          %p497 = pneg %p496
        $region66: #{stacked_gru_forward.1} parent=51 // pred_check_branch
          %499 = sbr.rel (%p497) target = $region68
        $region67: #{stacked_gru_forward.1} parent=51 // pred_region
          %v500 = vld [vmem:[#allocation2] sm:$0xf]
          %v501 = vld [vmem:[#allocation2 + $0x4] sm:$0xf]
          %v502 = vld [vmem:[%s359] sm:$0xf]
          %v503 = vld [vmem:[%s359 + $0x4] sm:$0xf]
          %v504 = vld [vmem:[%s359 + $0x8] sm:$0xf]
          %v505 = vld [vmem:[%s359 + $0xc] sm:$0xf]
          %v508 = vunpack.c.l.b16 %v500
          %v509 = vunpack.c.l.b16 %v501
          %v510 = vpack.c.b16 %v509, %v508
          %v515 = vunpack.c.l.b16 %v502
          %v516 = vunpack.c.l.b16 %v503
          %v517 = vunpack.c.l.b16 %v504
          %v518 = vunpack.c.l.b16 %v505
          %v519 = vpack.c.b16 %v516, %v515
          %v520 = vpack.c.b16 %v518, %v517
          %vm523 = vcmask 261120
          %v525 = vsel %vm523, %v510, 0
          %527 = vmatpush.bf16.msra.mxu0 0
          %528 = vmatpush.bf16.msra.mxu0 0
          %529 = vmatpush.bf16.msra.mxu0 0
          %530 = vmatpush.bf16.msra.mxu0 0
          %531 = vmatpush.bf16.msra.mxu0 0
          %532 = vmatpush.bf16.msra.mxu0 0
          %533 = vmatpush.bf16.msra.mxu0 %v520
          %534 = vmatpush.bf16.msra.mxu0 %v519
          %535 = vmatmul.bf16.gmra.mxu0 %v525
          %v536 = vpop.f32.mrf.mxu0
          %v537 = vadd.f32 0.0, %v536
          %v538 = vpop.f32.mrf.mxu0
          %v539 = vadd.f32 0.0, %v538
          %540 = vdwg.mxu0
          %vm541 = vcmask 785408
          %542 = vst.msk [vmem:[#allocation3] sm:$0xff] %vm541, %v537
          %543 = vst.msk [vmem:[#allocation3 + $0x8] sm:$0xff] %vm541, %v539
        $region68: #{stacked_gru_forward.1} parent=51 // pred_fallthru
          _
        %v544 = vld [vmem:[%s416] sm:$0xff]
        %v545 = vld [vmem:[%s416 + $0x8] sm:$0xff]
        %v546 = vpack.c.bf16 %v545, %v544
        %v547 = vld [vmem:[%s424] sm:$0xf]
        %v548 = vld [vmem:[%s424 + $0x4] sm:$0xf]
        %v549 = vld [vmem:[%s424 + $0x8] sm:$0xf]
        %v550 = vld [vmem:[%s424 + $0xc] sm:$0xf]
        %v555 = vunpack.c.l.b16 %v547
        %v556 = vunpack.c.l.b16 %v548
        %v557 = vunpack.c.l.b16 %v549
        %v558 = vunpack.c.l.b16 %v550
        %v559 = vpack.c.b16 %v556, %v555
        %v560 = vpack.c.b16 %v558, %v557
        %vm563 = vcmask 261120
        %v565 = vsel %vm563, %v546, 0
        %567 = vmatpush.bf16.msra.mxu0 0
        %568 = vmatpush.bf16.msra.mxu0 0
        %569 = vmatpush.bf16.msra.mxu0 0
        %570 = vmatpush.bf16.msra.mxu0 0
        %571 = vmatpush.bf16.msra.mxu0 0
        %572 = vmatpush.bf16.msra.mxu0 0
        %573 = vmatpush.bf16.msra.mxu0 %v560
        %574 = vmatpush.bf16.msra.mxu0 %v559
        %575 = vmatmul.bf16.gmra.mxu0 %v565
        %v576 = vpop.f32.mrf.mxu0
        %v577 = vadd.f32 0.0, %v576
        %v578 = vpop.f32.mrf.mxu0
        %v579 = vadd.f32 0.0, %v578
        %580 = vdwg.mxu0
        %v581 = vld [vmem:[#allocation3] sm:$0xff]
        %v582 = vld [vmem:[#allocation3 + $0x8] sm:$0xff]
        %v583 = vadd.f32 %v581, %v577
        %v584 = vadd.f32 %v582, %v579
        %v585 = vld [vmem:[%s427] sm:$0x1]
        %v587 = vperm.slane %v585, 0
        %v589 = vadd.f32 %v583, %v587
        %v590 = vadd.f32 %v584, %v587
        %v591 = vxor.u32 %v589, 2147483648
        %v592 = vxor.u32 %v590, 2147483648
        %v593 = vmul.f32 %v591, 1.442695
        %v594 = vpow.pop %v593
        %v595 = vmul.f32 %v592, 1.442695
        %v596 = vpow.pop %v595
        %v597 = vadd.f32 %v594, 1.0
        %v598 = vadd.f32 %v596, 1.0
        %v599 = vrcp.pop %v597
        %v600 = vmul.f32 %v597, %v599
        %v601 = vsub.f32 1.0, %v600
        %v602 = vmul.f32 %v599, %v601
        %v603 = vadd.f32 %v599, %v602
        %vm604 = vweird.f32 %v597
        %vm605 = vweird.f32 %v599
        %vm606 = vmor %vm604, %vm605
        %v607 = vsel %vm606, %v599, %v603
        %v608 = vand.u32 2147483647, %v597
        %vm609 = vcmp.eq.f32.partialorder %v608, 8.507059e+37
        %v610 = vand.u32 %v597, 2147483648
        %v611 = vor.u32 1.1754944e-38, %v610
        %v612 = vsel %vm609, %v611, %v607
        %v613 = vmul.f32 1.0, %v612
        %v614 = vrcp.pop %v598
        %v615 = vmul.f32 %v598, %v614
        %v616 = vsub.f32 1.0, %v615
        %v617 = vmul.f32 %v614, %v616
        %v618 = vadd.f32 %v614, %v617
        %vm619 = vweird.f32 %v598
        %vm620 = vweird.f32 %v614
        %vm621 = vmor %vm619, %vm620
        %v622 = vsel %vm621, %v614, %v618
        %v623 = vand.u32 2147483647, %v598
        %vm624 = vcmp.eq.f32.partialorder %v623, 8.507059e+37
        %v625 = vand.u32 %v598, 2147483648
        %v626 = vor.u32 1.1754944e-38, %v625
        %v627 = vsel %vm624, %v626, %v622
        %v628 = vmul.f32 1.0, %v627
        %v629 = vld [vmem:[%s430] sm:$0x1]
        %v631 = vperm.slane %v629, 0
        %632 = vrot.lane.b32.xlu0 %v631, 64
        %v633 = vpop.permute.xlu0 %632
        %v635 = vadd.f32 %v581, %v633
        %v636 = vadd.f32 %v582, %v633
        %v637 = vld [vmem:[%s433] sm:$0x1]
        %v639 = vperm.slane %v637, 0
        %640 = vrot.lane.b32.xlu0 %v639, 64
        %v641 = vpop.permute.xlu0 %640
        %v643 = vadd.f32 %v577, %v641
        %v644 = vadd.f32 %v579, %v641
        %647 = vrot.lane.b32.xlu0 %v643, 64
        %v648 = vpop.permute.xlu0 %647
        %649 = vrot.lane.b32.xlu0 %v644, 64
        %v650 = vpop.permute.xlu0 %649
        %v653 = vmul.f32 %v613, %v648
        %v654 = vmul.f32 %v628, %v650
        %657 = vrot.lane.b32.xlu0 %v653, 64
        %v658 = vpop.permute.xlu0 %657
        %659 = vrot.lane.b32.xlu0 %v654, 64
        %v660 = vpop.permute.xlu0 %659
        %v663 = vadd.f32 %v635, %v658
        %v664 = vadd.f32 %v636, %v660
        %v665 = vtanh.pop %v663
        %v666 = vtanh.pop %v664
        %669 = vrot.lane.b32.xlu0 %v665, 64
        %v670 = vpop.permute.xlu0 %669
        %671 = vrot.lane.b32.xlu0 %v666, 64
        %v672 = vpop.permute.xlu0 %671
        %v675 = vsub.f32 %v544, %v670
        %v676 = vsub.f32 %v545, %v672
        %679 = vrot.lane.b32.xlu0 %v675, 32
        %v680 = vpop.permute.xlu0 %679
        %681 = vrot.lane.b32.xlu0 %v676, 32
        %v682 = vpop.permute.xlu0 %681
        %v685 = vmul.f32 %v613, %v680
        %v686 = vmul.f32 %v628, %v682
        %689 = vrot.lane.b32.xlu0 %v685, 32
        %v690 = vpop.permute.xlu0 %689
        %691 = vrot.lane.b32.xlu0 %v686, 32
        %v692 = vpop.permute.xlu0 %691
        %v695 = vadd.f32 %v665, %v690
        %v696 = vadd.f32 %v666, %v692
        %699 = vrot.lane.b32.xlu0 %v695, 64
        %v700 = vpop.permute.xlu0 %699
        %701 = vrot.lane.b32.xlu0 %v696, 64
        %v702 = vpop.permute.xlu0 %701
        %705 = vst.msk [vmem:[%s438] sm:$0xff] %vm563, %v700
        %706 = vst.msk [vmem:[%s438 + $0x8] sm:$0xff] %vm563, %v702
        %s707 = sadd.s32 %s23, 1
        %p708 = scmp.lt.s32.totalorder %s707, 3
        // Predicated region
        $region69: #{stacked_gru_forward.1} parent=51 // pred_check
          %p709 = pneg %p708
        $region70: #{stacked_gru_forward.1} parent=51 // pred_check_branch
          %711 = sbr.rel (%p709) target = $region72
        $region71: #{stacked_gru_forward.1} parent=51 // pred_region
          %v712 = vpack.c.bf16 %v695, %v695
          %v713 = vpack.c.bf16 %v696, %v696
          %716 = vrot.lane.b32.xlu0 %v712, 64
          %v717 = vpop.permute.xlu0 %716
          %718 = vrot.lane.b32.xlu0 %v713, 64
          %v719 = vpop.permute.xlu0 %718
          %vm722 = vcmask 257024
          %723 = vst.msk [vmem:[#allocation2] sm:$0xf] %vm722, %v717
          %724 = vst.msk [vmem:[#allocation2 + $0x4] sm:$0xf] %vm722, %v719
        $region72: #{stacked_gru_forward.1} parent=51 // pred_fallthru
          _
        %p725 = scmp.lt.s32.totalorder %s23, 2
        %s726 = scalar_select %p725, %s23, 2
        %s727 = smul.addr %s726, 2
        %s728 = smul.addr %s727, 8
        %s729 = scalar_lea.vmem %s8, %s728
        // Predicated region
        $region73: #{stacked_gru_forward.1} parent=51 // pred_check
          %p730 = pneg %p245
        $region74: #{stacked_gru_forward.1} parent=51 // pred_check_branch
          %732 = sbr.rel (%p730) target = $region76
        $region75: #{stacked_gru_forward.1} parent=51 // pred_region
          _
        $region76: #{stacked_gru_forward.1} parent=51 // pred_fallthru
          _
      $region52: #{stacked_gru_forward.1} parent=5 // pred_fallthru
        _
      %p733 = scmp.le.s32.totalorder 2, %s18
      // Predicated region
      $region77: #{stacked_gru_forward.1} parent=5 // pred_check
        %p734 = pneg %p733
      $region78: #{stacked_gru_forward.1} parent=5 // pred_check_branch
        %736 = sbr.rel (%p734) target = $region80
      $region79: #{stacked_gru_forward.1} parent=5 // pred_region
        %s737 = ssub.s32 %s18, 2
        // Predicated region
        $region81: #{stacked_gru_forward.1} parent=79 // pred_check
          %p738 = pneg %p251
        $region82: #{stacked_gru_forward.1} parent=79 // pred_check_branch
          %740 = sbr.rel (%p738) target = $region84
        $region83: #{stacked_gru_forward.1} parent=79 // pred_region
          %p741 = scmp.lt.s32.totalorder %s24, 2
          %s742 = scalar_select %p741, %s24, 2
          %s743 = smul.addr %s742, 2
          %s744 = smul.addr %s743, 8
          %s745 = scalar_lea.vmem %s8, %s744
        $region84: #{stacked_gru_forward.1} parent=79 // pred_fallthru
          _
      $region80: #{stacked_gru_forward.1} parent=5 // pred_fallthru
        _
    $region6: #{stacked_gru_forward.1} parent=1 // loop_footer
      %s22 = sadd.s32 1, %s18
    $region7: #{stacked_gru_forward.1} parent=1 // loop_footer_branch
      %17 = sbr.rel target = $region3
    $region8: #{stacked_gru_forward.1} parent=1 // loop_exit
      _
    %746 = vsyncpa [#allocation5], 1
    %s747 = scalar_lea.sflag [#allocation5], 1
    %748 = vsyncpa %s747, 1
    %749 = vsyncpa [#allocation7], 1
    %s750 = scalar_lea.sflag [#allocation7], 1
    %751 = vsyncpa %s750, 1

</llo_original>
